<compile_context>
chip_gen: v5e
topology: v5e:2x2
jax: 0.10.0
libtpu: 0.0.40
codegen_flags: <defaults>
</compile_context>

<pallas_src>
import functools

import jax
import jax.numpy as jnp
from jax.experimental import pallas as pl
from jax.experimental.pallas import tpu as pltpu

HIDDEN = 256
OUT_PAD = 128          # lane-dense output width; true q-value is column 0


def _round_up(x, m):
    return (x + m - 1) // m * m


def critic_kernel(sa_ref, w1_ref, b1_ref, w2_ref, b2_ref, w3_ref, b3_ref,
                  out_ref):
    # l1: (tile_B, S+A) @ (S+A, 256), f32 accumulate, bias add, ReLU.
    h1 = jnp.dot(sa_ref[...], w1_ref[...],
                 preferred_element_type=jnp.float32) + b1_ref[...]
    h1 = jnp.maximum(h1, 0.0)

    # l2: (tile_B, 256) @ (256, 256)
    h2 = jnp.dot(h1.astype(w2_ref.dtype), w2_ref[...],
                 preferred_element_type=jnp.float32) + b2_ref[...]
    h2 = jnp.maximum(h2, 0.0)

    # l3: (tile_B, 256) @ (256, 128) -- zero-padded cols => unmasked,
    # lane-dense store; the real q-value lives in column 0.
    out_ref[...] = jnp.dot(h2.astype(w3_ref.dtype), w3_ref[...],
                           preferred_element_type=jnp.float32) + b3_ref[...]


@functools.partial(jax.jit, static_argnames=("tile_b",))
def critic_forward(state, action, params, *, tile_b=256):
    """Pallas wrapper. state: (B, S) f32, action: (B, A) f32 -> (B, 1) f32."""
    B, S = state.shape
    A = action.shape[1]
    SA = S + A

    # Concatenate once in the wrapper -> single l1 matmul in the kernel.
    sa = jnp.concatenate([state, action], axis=1)

    # Batch tiling: pad B up to a multiple of the batch tile (>= 8 sublanes).
    tb = min(tile_b, _round_up(B, 8))
    padded_b = _round_up(B, tb)
    if padded_b != B:
        sa = jnp.pad(sa, ((0, padded_b - B), (0, 0)))
    sa = sa.astype(jnp.bfloat16)

    # bf16 weights (MXU-native); biases stay f32 as (1, N) broadcast rows.
    w1 = params["w1"].astype(jnp.bfloat16)
    w2 = params["w2"].astype(jnp.bfloat16)
    w3 = jnp.pad(params["w3"],
                 ((0, 0), (0, OUT_PAD - params["w3"].shape[1]))
                 ).astype(jnp.bfloat16)
    b1 = params["b1"].reshape(1, -1).astype(jnp.float32)
    b2 = params["b2"].reshape(1, -1).astype(jnp.float32)
    b3 = jnp.pad(params["b3"],
                 (0, OUT_PAD - params["b3"].shape[0])
                 ).reshape(1, -1).astype(jnp.float32)

    grid = (padded_b // tb,)

    # Weights/biases: constant index_map -> stay VMEM-resident (no per-step DMA).
    def resident(a):
        return pl.BlockSpec(a.shape, lambda i: (0,) * a.ndim)

    flops = 2 * padded_b * (SA * HIDDEN + HIDDEN * HIDDEN + HIDDEN * OUT_PAD)
    bytes_accessed = (sa.size * 2                      # bf16 activations in
                      + (w1.size + w2.size + w3.size) * 2
                      + (b1.size + b2.size + b3.size) * 4
                      + padded_b * OUT_PAD * 4)        # f32 output

    out = pl.pallas_call(
        critic_kernel,
        out_shape=jax.ShapeDtypeStruct((padded_b, OUT_PAD), jnp.float32),
        grid=grid,
        in_specs=[pl.BlockSpec((tb, SA), lambda i: (i, 0)),
                  resident(w1), resident(b1),
                  resident(w2), resident(b2),
                  resident(w3), resident(b3)],
        out_specs=pl.BlockSpec((tb, OUT_PAD), lambda i: (i, 0)),
        compiler_params=pltpu.CompilerParams(
            dimension_semantics=("parallel",)),
        cost_estimate=pl.CostEstimate(
            flops=flops, transcendentals=0, bytes_accessed=bytes_accessed),
    )(sa, w1, b1, w2, b2, w3, b3)

    return out[:B, :1]


def init_params(key, state_dim, action_dim):
    """Deterministic init mimicking nn.Linear's U(-1/sqrt(fan_in), 1/sqrt(fan_in))."""
    dims = [(state_dim + action_dim, HIDDEN), (HIDDEN, HIDDEN), (HIDDEN, 1)]
    params = {}
    for i, (fan_in, fan_out) in enumerate(dims, start=1):
        key, kw, kb = jax.random.split(key, 3)
        bound = 1.0 / jnp.sqrt(jnp.float32(fan_in))
        params[f"w{i}"] = jax.random.uniform(
            kw, (fan_in, fan_out), jnp.float32, -bound, bound)
        params[f"b{i}"] = jax.random.uniform(
            kb, (fan_out,), jnp.float32, -bound, bound)
    return params


def critic_reference(state, action, params, *, bf16=False):
    """Pure-JAX reference of the PyTorch forward (optionally bf16-matched)."""
    cast = (lambda x: x.astype(jnp.bfloat16)) if bf16 else (lambda x: x)
    sa = jnp.concatenate([state, action], axis=1)
    h1 = jax.nn.relu(jnp.dot(cast(sa), cast(params["w1"]),
                             preferred_element_type=jnp.float32)
                     + params["b1"])
    h2 = jax.nn.relu(jnp.dot(cast(h1), cast(params["w2"]),
                             preferred_element_type=jnp.float32)
                     + params["b2"])
    return (jnp.dot(cast(h2), cast(params["w3"]),
                    preferred_element_type=jnp.float32)
            + params["b3"])


if __name__ == "__main__":
    key = jax.random.PRNGKey(0)
    B, STATE_DIM, ACTION_DIM = 2, 8, 4

    k_params, k_state, k_action = jax.random.split(key, 3)
    params = init_params(k_params, STATE_DIM, ACTION_DIM)
    state = jax.random.normal(k_state, (B, STATE_DIM), jnp.float32)
    action = jax.random.normal(k_action, (B, ACTION_DIM), jnp.float32)

    q_pallas = critic_forward(state, action, params)
    jax.block_until_ready(q_pallas)
    assert q_pallas.shape == (B, 1), q_pallas.shape

    # Numerics-matched (bf16 weights, f32 accumulate) reference: tight check.
    q_ref_bf16 = critic_reference(state, action, params, bf16=True)
    assert jnp.allclose(q_pallas, q_ref_bf16, atol=2e-2, rtol=2e-2), (
        f"bf16-matched mismatch: {q_pallas} vs {q_ref_bf16}")

    # Full-f32 PyTorch-equivalent reference: loose check (bf16 weight cast).
    q_ref_f32 = critic_reference(state, action, params, bf16=False)
    assert jnp.allclose(q_pallas, q_ref_f32, atol=1e-1, rtol=1e-1), (
        f"f32 reference mismatch: {q_pallas} vs {q_ref_f32}")

    print("KERNEL_OK")
</pallas_src>

<mosaic_0001>
module attributes {stable_mosaic.version = 11 : i64} {
  func.func @critic_kernel(%arg0: i32, %arg1: memref<8x12xbf16, #tpu.memory_space<vmem>>, %arg2: memref<12x256xbf16, #tpu.memory_space<vmem>>, %arg3: memref<1x256xf32, #tpu.memory_space<vmem>>, %arg4: memref<256x256xbf16, #tpu.memory_space<vmem>>, %arg5: memref<1x256xf32, #tpu.memory_space<vmem>>, %arg6: memref<256x128xbf16, #tpu.memory_space<vmem>>, %arg7: memref<1x128xf32, #tpu.memory_space<vmem>>, %arg8: memref<8x128xf32, #tpu.memory_space<vmem>>) attributes {dimension_semantics = [#tpu.dimension_semantics<parallel>], iteration_bounds = array<i64: 1>, scalar_prefetch = 0 : i64, scratch_operands = 0 : i64, tpu.core_type = #tpu.core_type<tc>, window_params = [{transform_indices = @transform_0, window_bounds = array<i64: 8, 12>}, {pipeline_mode = #tpu.pipeline_mode<synchronous>, transform_indices = @transform_1, window_bounds = array<i64: 12, 256>}, {pipeline_mode = #tpu.pipeline_mode<synchronous>, transform_indices = @transform_2, window_bounds = array<i64: 1, 256>}, {pipeline_mode = #tpu.pipeline_mode<synchronous>, transform_indices = @transform_3, window_bounds = array<i64: 256, 256>}, {pipeline_mode = #tpu.pipeline_mode<synchronous>, transform_indices = @transform_4, window_bounds = array<i64: 1, 256>}, {pipeline_mode = #tpu.pipeline_mode<synchronous>, transform_indices = @transform_5, window_bounds = array<i64: 256, 128>}, {pipeline_mode = #tpu.pipeline_mode<synchronous>, transform_indices = @transform_6, window_bounds = array<i64: 1, 128>}, {transform_indices = @transform_7, window_bounds = array<i64: 8, 128>}]} {
    %c0 = arith.constant 0 : index
    %c0_0 = arith.constant 0 : index
    %0 = vector.load %arg1[%c0, %c0_0] : memref<8x12xbf16, #tpu.memory_space<vmem>>, vector<8x12xbf16>
    %c0_1 = arith.constant 0 : index
    %c0_2 = arith.constant 0 : index
    %1 = vector.load %arg2[%c0_1, %c0_2] : memref<12x256xbf16, #tpu.memory_space<vmem>>, vector<12x256xbf16>
    %cst = arith.constant dense<0.000000e+00> : vector<8x256xf32>
    %2 = tpu.matmul %0, %1, %cst {dimension_numbers = #tpu.dot_dimension_numbers<[1], [0], [0], [1], [0, 0, 1, 1], [], []>} : vector<8x12xbf16>, vector<12x256xbf16>, vector<8x256xf32> -> vector<8x256xf32>
    %c0_3 = arith.constant 0 : index
    %c0_4 = arith.constant 0 : index
    %3 = vector.load %arg3[%c0_3, %c0_4] : memref<1x256xf32, #tpu.memory_space<vmem>>, vector<1x256xf32>
    %4 = vector.broadcast %3 : vector<1x256xf32> to vector<8x256xf32>
    %5 = arith.addf %2, %4 : vector<8x256xf32>
    %cst_5 = arith.constant 0.000000e+00 : f32
    %6 = vector.broadcast %cst_5 : f32 to vector<8x256xf32>
    %7 = arith.maximumf %5, %6 : vector<8x256xf32>
    %8 = arith.truncf %7 : vector<8x256xf32> to vector<8x256xbf16>
    %c0_6 = arith.constant 0 : index
    %c0_7 = arith.constant 0 : index
    %9 = vector.load %arg4[%c0_6, %c0_7] : memref<256x256xbf16, #tpu.memory_space<vmem>>, vector<256x256xbf16>
    %cst_8 = arith.constant dense<0.000000e+00> : vector<8x256xf32>
    %10 = tpu.matmul %8, %9, %cst_8 {dimension_numbers = #tpu.dot_dimension_numbers<[1], [0], [0], [1], [0, 0, 1, 1], [], []>} : vector<8x256xbf16>, vector<256x256xbf16>, vector<8x256xf32> -> vector<8x256xf32>
    %c0_9 = arith.constant 0 : index
    %c0_10 = arith.constant 0 : index
    %11 = vector.load %arg5[%c0_9, %c0_10] : memref<1x256xf32, #tpu.memory_space<vmem>>, vector<1x256xf32>
    %12 = vector.broadcast %11 : vector<1x256xf32> to vector<8x256xf32>
    %13 = arith.addf %10, %12 : vector<8x256xf32>
    %cst_11 = arith.constant 0.000000e+00 : f32
    %14 = vector.broadcast %cst_11 : f32 to vector<8x256xf32>
    %15 = arith.maximumf %13, %14 : vector<8x256xf32>
    %16 = arith.truncf %15 : vector<8x256xf32> to vector<8x256xbf16>
    %c0_12 = arith.constant 0 : index
    %c0_13 = arith.constant 0 : index
    %17 = vector.load %arg6[%c0_12, %c0_13] : memref<256x128xbf16, #tpu.memory_space<vmem>>, vector<256x128xbf16>
    %cst_14 = arith.constant dense<0.000000e+00> : vector<8x128xf32>
    %18 = tpu.matmul %16, %17, %cst_14 {dimension_numbers = #tpu.dot_dimension_numbers<[1], [0], [0], [1], [0, 0, 1, 1], [], []>} : vector<8x256xbf16>, vector<256x128xbf16>, vector<8x128xf32> -> vector<8x128xf32>
    %c0_15 = arith.constant 0 : index
    %c0_16 = arith.constant 0 : index
    %19 = vector.load %arg7[%c0_15, %c0_16] : memref<1x128xf32, #tpu.memory_space<vmem>>, vector<1x128xf32>
    %20 = vector.broadcast %19 : vector<1x128xf32> to vector<8x128xf32>
    %21 = arith.addf %18, %20 : vector<8x128xf32>
    %c0_17 = arith.constant 0 : index
    %c0_18 = arith.constant 0 : index
    %22 = vector.load %arg8[%c0_17, %c0_18] : memref<8x128xf32, #tpu.memory_space<vmem>>, vector<8x128xf32>
    tpu.vector_store %arg8[%c0_17, %c0_18], %21 {strides = array<i32>} : memref<8x128xf32, #tpu.memory_space<vmem>>, vector<8x128xf32>,
    return
  }
  func.func @transform_0(%arg0: i32) -> (i32, i32) {
    %c0_i32 = arith.constant 0 : i32
    %c0_i32_0 = arith.constant 0 : i32
    return %arg0, %c0_i32 : i32, i32
  }
  func.func @transform_1(%arg0: i32) -> (i32, i32) {
    %c0_i32 = arith.constant 0 : i32
    %c0_i32_0 = arith.constant 0 : i32
    %c0_i32_1 = arith.constant 0 : i32
    return %c0_i32, %c0_i32_0 : i32, i32
  }
  func.func @transform_2(%arg0: i32) -> (i32, i32) {
    %c0_i32 = arith.constant 0 : i32
    %c0_i32_0 = arith.constant 0 : i32
    %c0_i32_1 = arith.constant 0 : i32
    return %c0_i32, %c0_i32_0 : i32, i32
  }
  func.func @transform_3(%arg0: i32) -> (i32, i32) {
    %c0_i32 = arith.constant 0 : i32
    %c0_i32_0 = arith.constant 0 : i32
    %c0_i32_1 = arith.constant 0 : i32
    return %c0_i32, %c0_i32_0 : i32, i32
  }
  func.func @transform_4(%arg0: i32) -> (i32, i32) {
    %c0_i32 = arith.constant 0 : i32
    %c0_i32_0 = arith.constant 0 : i32
    %c0_i32_1 = arith.constant 0 : i32
    return %c0_i32, %c0_i32_0 : i32, i32
  }
  func.func @transform_5(%arg0: i32) -> (i32, i32) {
    %c0_i32 = arith.constant 0 : i32
    %c0_i32_0 = arith.constant 0 : i32
    %c0_i32_1 = arith.constant 0 : i32
    return %c0_i32, %c0_i32_0 : i32, i32
  }
  func.func @transform_6(%arg0: i32) -> (i32, i32) {
    %c0_i32 = arith.constant 0 : i32
    %c0_i32_0 = arith.constant 0 : i32
    %c0_i32_1 = arith.constant 0 : i32
    return %c0_i32, %c0_i32_0 : i32, i32
  }
  func.func @transform_7(%arg0: i32) -> (i32, i32) {
    %c0_i32 = arith.constant 0 : i32
    %c0_i32_0 = arith.constant 0 : i32
    return %arg0, %c0_i32 : i32, i32
  }
}

</mosaic_0001>

<llo_original>
// kernel: critic_forward.1
$region0: #{critic_forward.1}
  #allocation0 [shape = 'u32[]', space=smem, size = 0x4, offset = 0x4, fixed_abs, tag = 'smem constant byte address 0x4 - core index']
  #allocation1 [shape = 'u32[72,128]{1,0:T(1,128)}', space=vmem, size = 0x9000, scoped, tag = 'internal scratch']
  %s0 = inlined_call_operand.vmem [shape: bf16[8,12], index: 0, kind: input, shape index: {}]
  %s1 = inlined_call_operand.vmem [shape: bf16[12,256], index: 1, kind: input, shape index: {}]
  %s2 = inlined_call_operand.vmem [shape: f32[1,256], index: 2, kind: input, shape index: {}]
  %s3 = inlined_call_operand.vmem [shape: bf16[256,256], index: 3, kind: input, shape index: {}]
  %s4 = inlined_call_operand.vmem [shape: f32[1,256], index: 4, kind: input, shape index: {}]
  %s5 = inlined_call_operand.vmem [shape: bf16[256,128], index: 5, kind: input, shape index: {}]
  %s6 = inlined_call_operand.vmem [shape: f32[1,128], index: 6, kind: input, shape index: {}]
  %s7 = inlined_call_operand.vmem [shape: f32[8,128], index: 7, kind: output, shape index: {}]
  %s8 = sld [smem:[#allocation0]]
  $region38: #{critic_forward.1} parent=0
    _
  %s10 = ssub.s32 1, %s8
  %s11 = scalar_select 0, %s10, %s8
  // Predicated region
  $region2: #{critic_forward.1} parent=0 // pred_check
    _
  $region3: #{critic_forward.1} parent=0 // pred_check_branch
    %13 = sbr.rel (0) target = $region5
  $region4: #{critic_forward.1} parent=0 // pred_region
    _
  $region5: #{critic_forward.1} parent=0 // pred_fallthru
    _
  // Predicated region
  $region6: #{critic_forward.1} parent=0 // pred_check
    _
  $region7: #{critic_forward.1} parent=0 // pred_check_branch
    %15 = sbr.rel (0) target = $region9
  $region8: #{critic_forward.1} parent=0 // pred_region
    _
  $region9: #{critic_forward.1} parent=0 // pred_fallthru
    _
  // Predicated region
  $region10: #{critic_forward.1} parent=0 // pred_check
    _
  $region11: #{critic_forward.1} parent=0 // pred_check_branch
    %17 = sbr.rel (0) target = $region13
  $region12: #{critic_forward.1} parent=0 // pred_region
    _
  $region13: #{critic_forward.1} parent=0 // pred_fallthru
    _
  // Predicated region
  $region14: #{critic_forward.1} parent=0 // pred_check
    _
  $region15: #{critic_forward.1} parent=0 // pred_check_branch
    %19 = sbr.rel (0) target = $region17
  $region16: #{critic_forward.1} parent=0 // pred_region
    _
  $region17: #{critic_forward.1} parent=0 // pred_fallthru
    _
  // Predicated region
  $region18: #{critic_forward.1} parent=0 // pred_check
    _
  $region19: #{critic_forward.1} parent=0 // pred_check_branch
    %21 = sbr.rel (0) target = $region21
  $region20: #{critic_forward.1} parent=0 // pred_region
    _
  $region21: #{critic_forward.1} parent=0 // pred_fallthru
    _
  // Predicated region
  $region22: #{critic_forward.1} parent=0 // pred_check
    _
  $region23: #{critic_forward.1} parent=0 // pred_check_branch
    %23 = sbr.rel (0) target = $region25
  $region24: #{critic_forward.1} parent=0 // pred_region
    _
  $region25: #{critic_forward.1} parent=0 // pred_fallthru
    _
  // Predicated region
  $region26: #{critic_forward.1} parent=0 // pred_check
    _
  $region27: #{critic_forward.1} parent=0 // pred_check_branch
    %25 = sbr.rel (0) target = $region29
  $region28: #{critic_forward.1} parent=0 // pred_region
    _
  $region29: #{critic_forward.1} parent=0 // pred_fallthru
    _
  %v27 = vld [vmem:[%s0] sm:$0xf]
  %v28 = vld [vmem:[%s1] sm:$0xff]
  %v29 = vld [vmem:[%s1 + $0x8] sm:$0x33]
  %v30 = vld [vmem:[%s2] sm:$0x3]
  %v32 = vperm.slane %v30, 0
  %v33 = vperm.slane %v30, 1
  %v38 = vunpack.c.l.b16 %v28
  %v39 = vunpack.c.h.b16 %v28
  %v40 = vunpack.c.l.b16 %v29
  %v41 = vunpack.c.h.b16 %v29
  %v42 = vpack.c.b16 %v40, %v38
  %v43 = vpack.c.b16 %v41, %v39
  %vm44 = vcmask 97280
  %v46 = vsel %vm44, %v27, 0
  %vm48 = vcmask 1045504
  %v50 = vsel %vm48, %v42, 0
  %v53 = vsel %vm48, %v43, 0
  %55 = vmatpush.bf16.msra.mxu0 0
  %56 = vmatpush.bf16.msra.mxu0 0
  %57 = vmatpush.bf16.msra.mxu0 0
  %58 = vmatpush.bf16.msra.mxu0 0
  %59 = vmatpush.bf16.msra.mxu0 0
  %60 = vmatpush.bf16.msra.mxu0 0
  %61 = vmatpush.bf16.msra.mxu0 0
  %62 = vmatpush.bf16.msra.mxu0 %v50
  %63 = vmatmul.bf16.gmra.mxu0 %v46
  %v64 = vpop.f32.mrf.mxu0
  %v65 = vadd.f32 %v32, %v64
  %v66 = vpop.f32.mrf.mxu0
  %67 = vdwg.mxu0
  %68 = vmatpush.bf16.msra.mxu0 0
  %69 = vmatpush.bf16.msra.mxu0 0
  %70 = vmatpush.bf16.msra.mxu0 0
  %71 = vmatpush.bf16.msra.mxu0 0
  %72 = vmatpush.bf16.msra.mxu0 0
  %73 = vmatpush.bf16.msra.mxu0 0
  %74 = vmatpush.bf16.msra.mxu0 0
  %75 = vmatpush.bf16.msra.mxu0 %v53
  %76 = vmatmul.bf16.gmra.mxu0 %v46
  %v77 = vpop.f32.mrf.mxu0
  %v78 = vadd.f32 %v33, %v77
  %v79 = vpop.f32.mrf.mxu0
  %80 = vdwg.mxu0
  %v81 = vmax.f32 %v65, 0.0
  %v82 = vmax.f32 %v78, 0.0
  %v83 = vpack.c.bf16 %v81, %v81
  %v84 = vpack.c.bf16 %v82, %v82
  %v85 = vld [vmem:[%s3] sm:$0xff]
  %v86 = vld [vmem:[%s3 + $0x8] sm:$0xff]
  %v87 = vld [vmem:[%s3 + $0x10] sm:$0xff]
  %v88 = vld [vmem:[%s3 + $0x18] sm:$0xff]
  %v89 = vld [vmem:[%s3 + $0x20] sm:$0xff]
  %v90 = vld [vmem:[%s3 + $0x28] sm:$0xff]
  %v91 = vld [vmem:[%s3 + $0x30] sm:$0xff]
  %v92 = vld [vmem:[%s3 + $0x38] sm:$0xff]
  %v93 = vld [vmem:[%s3 + $0x40] sm:$0xff]
  %v94 = vld [vmem:[%s3 + $0x48] sm:$0xff]
  %v95 = vld [vmem:[%s3 + $0x50] sm:$0xff]
  %v96 = vld [vmem:[%s3 + $0x58] sm:$0xff]
  %v97 = vld [vmem:[%s3 + $0x60] sm:$0xff]
  %v98 = vld [vmem:[%s3 + $0x68] sm:$0xff]
  %v99 = vld [vmem:[%s3 + $0x70] sm:$0xff]
  %v100 = vld [vmem:[%s3 + $0x78] sm:$0xff]
  %v101 = vld [vmem:[%s3 + $0x80] sm:$0xff]
  %v102 = vld [vmem:[%s3 + $0x88] sm:$0xff]
  %v103 = vld [vmem:[%s3 + $0x90] sm:$0xff]
  %v104 = vld [vmem:[%s3 + $0x98] sm:$0xff]
  %v105 = vld [vmem:[%s3 + $0xa0] sm:$0xff]
  %v106 = vld [vmem:[%s3 + $0xa8] sm:$0xff]
  %v107 = vld [vmem:[%s3 + $0xb0] sm:$0xff]
  %v108 = vld [vmem:[%s3 + $0xb8] sm:$0xff]
  %v109 = vld [vmem:[%s3 + $0xc0] sm:$0xff]
  %v110 = vld [vmem:[%s3 + $0xc8] sm:$0xff]
  %v111 = vld [vmem:[%s3 + $0xd0] sm:$0xff]
  %v112 = vld [vmem:[%s3 + $0xd8] sm:$0xff]
  %v113 = vld [vmem:[%s3 + $0xe0] sm:$0xff]
  %v114 = vld [vmem:[%s3 + $0xe8] sm:$0xff]
  %v115 = vld [vmem:[%s3 + $0xf0] sm:$0xff]
  %v116 = vld [vmem:[%s3 + $0xf8] sm:$0xff]
  %v117 = vld [vmem:[%s4] sm:$0x3]
  %v119 = vperm.slane %v117, 0
  %v120 = vperm.slane %v117, 1
  %v155 = vunpack.c.l.b16 %v85
  %v156 = vunpack.c.h.b16 %v85
  %v157 = vunpack.c.l.b16 %v86
  %v158 = vunpack.c.h.b16 %v86
  %v159 = vunpack.c.l.b16 %v87
  %v160 = vunpack.c.h.b16 %v87
  %v161 = vunpack.c.l.b16 %v88
  %v162 = vunpack.c.h.b16 %v88
  %v163 = vunpack.c.l.b16 %v89
  %v164 = vunpack.c.h.b16 %v89
  %v165 = vunpack.c.l.b16 %v90
  %v166 = vunpack.c.h.b16 %v90
  %v167 = vunpack.c.l.b16 %v91
  %v168 = vunpack.c.h.b16 %v91
  %v169 = vunpack.c.l.b16 %v92
  %v170 = vunpack.c.h.b16 %v92
  %v171 = vunpack.c.l.b16 %v93
  %v172 = vunpack.c.h.b16 %v93
  %v173 = vunpack.c.l.b16 %v94
  %v174 = vunpack.c.h.b16 %v94
  %v175 = vunpack.c.l.b16 %v95
  %v176 = vunpack.c.h.b16 %v95
  %v177 = vunpack.c.l.b16 %v96
  %v178 = vunpack.c.h.b16 %v96
  %v179 = vunpack.c.l.b16 %v97
  %v180 = vunpack.c.h.b16 %v97
  %v181 = vunpack.c.l.b16 %v98
  %v182 = vunpack.c.h.b16 %v98
  %v183 = vunpack.c.l.b16 %v99
  %v184 = vunpack.c.h.b16 %v99
  %v185 = vunpack.c.l.b16 %v100
  %v186 = vunpack.c.h.b16 %v100
  %v187 = vunpack.c.l.b16 %v101
  %v188 = vunpack.c.h.b16 %v101
  %v189 = vunpack.c.l.b16 %v102
  %v190 = vunpack.c.h.b16 %v102
  %v191 = vunpack.c.l.b16 %v103
  %v192 = vunpack.c.h.b16 %v103
  %v193 = vunpack.c.l.b16 %v104
  %v194 = vunpack.c.h.b16 %v104
  %v195 = vunpack.c.l.b16 %v105
  %v196 = vunpack.c.h.b16 %v105
  %v197 = vunpack.c.l.b16 %v106
  %v198 = vunpack.c.h.b16 %v106
  %v199 = vunpack.c.l.b16 %v107
  %v200 = vunpack.c.h.b16 %v107
  %v201 = vunpack.c.l.b16 %v108
  %v202 = vunpack.c.h.b16 %v108
  %v203 = vunpack.c.l.b16 %v109
  %v204 = vunpack.c.h.b16 %v109
  %v205 = vunpack.c.l.b16 %v110
  %v206 = vunpack.c.h.b16 %v110
  %v207 = vunpack.c.l.b16 %v111
  %v208 = vunpack.c.h.b16 %v111
  %v209 = vunpack.c.l.b16 %v112
  %v210 = vunpack.c.h.b16 %v112
  %v211 = vunpack.c.l.b16 %v113
  %v212 = vunpack.c.h.b16 %v113
  %v213 = vunpack.c.l.b16 %v114
  %v214 = vunpack.c.h.b16 %v114
  %v215 = vunpack.c.l.b16 %v115
  %v216 = vunpack.c.h.b16 %v115
  %v217 = vunpack.c.l.b16 %v116
  %v218 = vunpack.c.h.b16 %v116
  %v219 = vpack.c.b16 %v157, %v155
  %v220 = vpack.c.b16 %v158, %v156
  %v221 = vpack.c.b16 %v161, %v159
  %v222 = vpack.c.b16 %v162, %v160
  %v223 = vpack.c.b16 %v165, %v163
  %v224 = vpack.c.b16 %v166, %v164
  %v225 = vpack.c.b16 %v169, %v167
  %v226 = vpack.c.b16 %v170, %v168
  %v227 = vpack.c.b16 %v173, %v171
  %v228 = vpack.c.b16 %v174, %v172
  %v229 = vpack.c.b16 %v177, %v175
  %v230 = vpack.c.b16 %v178, %v176
  %v231 = vpack.c.b16 %v181, %v179
  %v232 = vpack.c.b16 %v182, %v180
  %v233 = vpack.c.b16 %v185, %v183
  %v234 = vpack.c.b16 %v186, %v184
  %v235 = vpack.c.b16 %v189, %v187
  %v236 = vpack.c.b16 %v190, %v188
  %v237 = vpack.c.b16 %v193, %v191
  %v238 = vpack.c.b16 %v194, %v192
  %v239 = vpack.c.b16 %v197, %v195
  %v240 = vpack.c.b16 %v198, %v196
  %v241 = vpack.c.b16 %v201, %v199
  %v242 = vpack.c.b16 %v202, %v200
  %v243 = vpack.c.b16 %v205, %v203
  %v244 = vpack.c.b16 %v206, %v204
  %v245 = vpack.c.b16 %v209, %v207
  %v246 = vpack.c.b16 %v210, %v208
  %v247 = vpack.c.b16 %v213, %v211
  %v248 = vpack.c.b16 %v214, %v212
  %v249 = vpack.c.b16 %v217, %v215
  %v250 = vpack.c.b16 %v218, %v216
  %283 = vmatpush.bf16.msra.mxu0 %v233
  %284 = vmatpush.bf16.msra.mxu0 %v231
  %285 = vmatpush.bf16.msra.mxu0 %v229
  %286 = vmatpush.bf16.msra.mxu0 %v227
  %287 = vmatpush.bf16.msra.mxu0 %v225
  %288 = vmatpush.bf16.msra.mxu0 %v223
  %289 = vmatpush.bf16.msra.mxu0 %v221
  %290 = vmatpush.bf16.msra.mxu0 %v219
  %291 = vmatmul.bf16.gmra.mxu0 %v83
  %v292 = vpop.f32.mrf.mxu0
  %v293 = vadd.f32 %v119, %v292
  %v294 = vpop.f32.mrf.mxu0
  %295 = vdwg.mxu0
  %296 = vmatpush.bf16.msra.mxu0 %v249
  %297 = vmatpush.bf16.msra.mxu0 %v247
  %298 = vmatpush.bf16.msra.mxu0 %v245
  %299 = vmatpush.bf16.msra.mxu0 %v243
  %300 = vmatpush.bf16.msra.mxu0 %v241
  %301 = vmatpush.bf16.msra.mxu0 %v239
  %302 = vmatpush.bf16.msra.mxu0 %v237
  %303 = vmatpush.bf16.msra.mxu0 %v235
  %304 = vmatmul.bf16.gmra.mxu0 %v84
  %v305 = vpop.f32.mrf.mxu0
  %v306 = vadd.f32 %v293, %v305
  %v307 = vpop.f32.mrf.mxu0
  %308 = vdwg.mxu0
  %309 = vmatpush.bf16.msra.mxu0 %v234
  %310 = vmatpush.bf16.msra.mxu0 %v232
  %311 = vmatpush.bf16.msra.mxu0 %v230
  %312 = vmatpush.bf16.msra.mxu0 %v228
  %313 = vmatpush.bf16.msra.mxu0 %v226
  %314 = vmatpush.bf16.msra.mxu0 %v224
  %315 = vmatpush.bf16.msra.mxu0 %v222
  %316 = vmatpush.bf16.msra.mxu0 %v220
  %317 = vmatmul.bf16.gmra.mxu0 %v83
  %v318 = vpop.f32.mrf.mxu0
  %v319 = vadd.f32 %v120, %v318
  %v320 = vpop.f32.mrf.mxu0
  %321 = vdwg.mxu0
  %322 = vmatpush.bf16.msra.mxu0 %v250
  %323 = vmatpush.bf16.msra.mxu0 %v248
  %324 = vmatpush.bf16.msra.mxu0 %v246
  %325 = vmatpush.bf16.msra.mxu0 %v244
  %326 = vmatpush.bf16.msra.mxu0 %v242
  %327 = vmatpush.bf16.msra.mxu0 %v240
  %328 = vmatpush.bf16.msra.mxu0 %v238
  %329 = vmatpush.bf16.msra.mxu0 %v236
  %330 = vmatmul.bf16.gmra.mxu0 %v84
  %v331 = vpop.f32.mrf.mxu0
  %v332 = vadd.f32 %v319, %v331
  %v333 = vpop.f32.mrf.mxu0
  %334 = vdwg.mxu0
  %v335 = vmax.f32 %v306, 0.0
  %v336 = vmax.f32 %v332, 0.0
  %v337 = vpack.c.bf16 %v335, %v335
  %v338 = vpack.c.bf16 %v336, %v336
  %v339 = vld [vmem:[%s5] sm:$0xf]
  %v340 = vld [vmem:[%s5 + $0x4] sm:$0xf]
  %v341 = vld [vmem:[%s5 + $0x8] sm:$0xf]
  %v342 = vld [vmem:[%s5 + $0xc] sm:$0xf]
  %v343 = vld [vmem:[%s5 + $0x10] sm:$0xf]
  %v344 = vld [vmem:[%s5 + $0x14] sm:$0xf]
  %v345 = vld [vmem:[%s5 + $0x18] sm:$0xf]
  %v346 = vld [vmem:[%s5 + $0x1c] sm:$0xf]
  %v347 = vld [vmem:[%s5 + $0x20] sm:$0xf]
  %v348 = vld [vmem:[%s5 + $0x24] sm:$0xf]
  %v349 = vld [vmem:[%s5 + $0x28] sm:$0xf]
  %v350 = vld [vmem:[%s5 + $0x2c] sm:$0xf]
  %v351 = vld [vmem:[%s5 + $0x30] sm:$0xf]
  %v352 = vld [vmem:[%s5 + $0x34] sm:$0xf]
  %v353 = vld [vmem:[%s5 + $0x38] sm:$0xf]
  %v354 = vld [vmem:[%s5 + $0x3c] sm:$0xf]
  %v355 = vld [vmem:[%s5 + $0x40] sm:$0xf]
  %v356 = vld [vmem:[%s5 + $0x44] sm:$0xf]
  %v357 = vld [vmem:[%s5 + $0x48] sm:$0xf]
  %v358 = vld [vmem:[%s5 + $0x4c] sm:$0xf]
  %v359 = vld [vmem:[%s5 + $0x50] sm:$0xf]
  %v360 = vld [vmem:[%s5 + $0x54] sm:$0xf]
  %v361 = vld [vmem:[%s5 + $0x58] sm:$0xf]
  %v362 = vld [vmem:[%s5 + $0x5c] sm:$0xf]
  %v363 = vld [vmem:[%s5 + $0x60] sm:$0xf]
  %v364 = vld [vmem:[%s5 + $0x64] sm:$0xf]
  %v365 = vld [vmem:[%s5 + $0x68] sm:$0xf]
  %v366 = vld [vmem:[%s5 + $0x6c] sm:$0xf]
  %v367 = vld [vmem:[%s5 + $0x70] sm:$0xf]
  %v368 = vld [vmem:[%s5 + $0x74] sm:$0xf]
  %v369 = vld [vmem:[%s5 + $0x78] sm:$0xf]
  %v370 = vld [vmem:[%s5 + $0x7c] sm:$0xf]
  %v371 = vld [vmem:[%s6] sm:$0x1]
  %v373 = vperm.slane %v371, 0
  %v407 = vunpack.c.l.b16 %v339
  %v408 = vunpack.c.l.b16 %v340
  %v409 = vunpack.c.l.b16 %v341
  %v410 = vunpack.c.l.b16 %v342
  %v411 = vunpack.c.l.b16 %v343
  %v412 = vunpack.c.l.b16 %v344
  %v413 = vunpack.c.l.b16 %v345
  %v414 = vunpack.c.l.b16 %v346
  %v415 = vunpack.c.l.b16 %v347
  %v416 = vunpack.c.l.b16 %v348
  %v417 = vunpack.c.l.b16 %v349
  %v418 = vunpack.c.l.b16 %v350
  %v419 = vunpack.c.l.b16 %v351
  %v420 = vunpack.c.l.b16 %v352
  %v421 = vunpack.c.l.b16 %v353
  %v422 = vunpack.c.l.b16 %v354
  %v423 = vunpack.c.l.b16 %v355
  %v424 = vunpack.c.l.b16 %v356
  %v425 = vunpack.c.l.b16 %v357
  %v426 = vunpack.c.l.b16 %v358
  %v427 = vunpack.c.l.b16 %v359
  %v428 = vunpack.c.l.b16 %v360
  %v429 = vunpack.c.l.b16 %v361
  %v430 = vunpack.c.l.b16 %v362
  %v431 = vunpack.c.l.b16 %v363
  %v432 = vunpack.c.l.b16 %v364
  %v433 = vunpack.c.l.b16 %v365
  %v434 = vunpack.c.l.b16 %v366
  %v435 = vunpack.c.l.b16 %v367
  %v436 = vunpack.c.l.b16 %v368
  %v437 = vunpack.c.l.b16 %v369
  %v438 = vunpack.c.l.b16 %v370
  %v439 = vpack.c.b16 %v408, %v407
  %v440 = vpack.c.b16 %v410, %v409
  %v441 = vpack.c.b16 %v412, %v411
  %v442 = vpack.c.b16 %v414, %v413
  %v443 = vpack.c.b16 %v416, %v415
  %v444 = vpack.c.b16 %v418, %v417
  %v445 = vpack.c.b16 %v420, %v419
  %v446 = vpack.c.b16 %v422, %v421
  %v447 = vpack.c.b16 %v424, %v423
  %v448 = vpack.c.b16 %v426, %v425
  %v449 = vpack.c.b16 %v428, %v427
  %v450 = vpack.c.b16 %v430, %v429
  %v451 = vpack.c.b16 %v432, %v431
  %v452 = vpack.c.b16 %v434, %v433
  %v453 = vpack.c.b16 %v436, %v435
  %v454 = vpack.c.b16 %v438, %v437
  %471 = vmatpush.bf16.msra.mxu0 %v446
  %472 = vmatpush.bf16.msra.mxu0 %v445
  %473 = vmatpush.bf16.msra.mxu0 %v444
  %474 = vmatpush.bf16.msra.mxu0 %v443
  %475 = vmatpush.bf16.msra.mxu0 %v442
  %476 = vmatpush.bf16.msra.mxu0 %v441
  %477 = vmatpush.bf16.msra.mxu0 %v440
  %478 = vmatpush.bf16.msra.mxu0 %v439
  %479 = vmatmul.bf16.gmra.mxu0 %v337
  %v480 = vpop.f32.mrf.mxu0
  %v481 = vadd.f32 %v373, %v480
  %v482 = vpop.f32.mrf.mxu0
  %483 = vdwg.mxu0
  %484 = vmatpush.bf16.msra.mxu0 %v454
  %485 = vmatpush.bf16.msra.mxu0 %v453
  %486 = vmatpush.bf16.msra.mxu0 %v452
  %487 = vmatpush.bf16.msra.mxu0 %v451
  %488 = vmatpush.bf16.msra.mxu0 %v450
  %489 = vmatpush.bf16.msra.mxu0 %v449
  %490 = vmatpush.bf16.msra.mxu0 %v448
  %491 = vmatpush.bf16.msra.mxu0 %v447
  %492 = vmatmul.bf16.gmra.mxu0 %v338
  %v493 = vpop.f32.mrf.mxu0
  %v494 = vadd.f32 %v481, %v493
  %v495 = vpop.f32.mrf.mxu0
  %496 = vdwg.mxu0
  %497 = vst [vmem:[%s7] sm:$0xff] %v494
  // Predicated region
  $region30: #{critic_forward.1} parent=0 // pred_check
    _
  $region31: #{critic_forward.1} parent=0 // pred_check_branch
    %499 = sbr.rel (0) target = $region33
  $region32: #{critic_forward.1} parent=0 // pred_region
    _
  $region33: #{critic_forward.1} parent=0 // pred_fallthru
    _
  // Predicated region
  $region34: #{critic_forward.1} parent=0 // pred_check
    _
  $region35: #{critic_forward.1} parent=0 // pred_check_branch
    %501 = sbr.rel (0) target = $region37
  $region36: #{critic_forward.1} parent=0 // pred_region
    _
  $region37: #{critic_forward.1} parent=0 // pred_fallthru
    _

</llo_original>
